<compile_context>
chip_gen: v7x
topology: tpu7x:2x2x1
jax: 0.10.0
libtpu: 0.0.40
codegen_flags: <defaults>
</compile_context>

<pallas_src>
import functools

import jax
import jax.numpy as jnp
from jax.experimental import pallas as pl
from jax.experimental.pallas import tpu as pltpu

_LN_EPS = 1e-5
_MAX_TILE_N = 1024      # 512-1024 rows already sit near the HBM roofline


def _round_up(x, m):
    return ((x + m - 1) // m) * m


def _tpu_info():
    try:
        return pltpu.get_tpu_info()
    except Exception:
        return None


def _vmem_limit_bytes():
    """Scoped-VMEM limit: ~3/4 of physical per-core VMEM, capped at 96 MiB."""
    info = _tpu_info()
    cap = None
    if info is not None:
        cap = getattr(info, "vmem_capacity_bytes", None)
    if not cap:
        cap = 64 * 1024 * 1024  # conservative fallback (v7x-sized per-TC VMEM)
    return int(min((int(cap) * 3) // 4, 96 * 1024 * 1024))


def _num_tensorcores():
    """Best-effort TensorCore-per-chip count (v5e/v6e: 1, v7x: 2)."""
    info = _tpu_info()
    if info is not None:
        for attr in ("num_cores", "num_tensorcores", "tensorcores_per_chip",
                     "core_count"):
            v = getattr(info, attr, None)
            if isinstance(v, int) and v > 0:
                return v
    # Unknown: assume 2 (megacore). Cost of being wrong on a 1-TC chip is only a
    # couple of ~0.35 us grid steps, while under-splitting on v7x halves throughput.
    return 2


def _pick_tile_n(n_rows, d, itemsize, vmem_limit, num_cores):
    """Largest row tile whose pipelined footprint (I/O + f32 temps) fits VMEM."""
    sublane = 16 if itemsize == 2 else 8          # bf16 needs (16,128) tiling
    # Per row: 2x input + 2x output pipeline buffers in x.dtype, plus the
    # simultaneously-live f32 temporaries inside the kernel (x upcast, x*x / y):
    # ~3 f32 arrays => ~12 bytes/elem.
    bytes_per_row = 4 * d * itemsize + 12 * d
    budget = (vmem_limit * 9) // 10               # small headroom for misc scratch
    fit = max(sublane, budget // max(bytes_per_row, 1))
    # Keep >= 2 grid steps per TensorCore (when N permits) so the "parallel" axis
    # can be sharded across v7x's two cores; on 1-TC chips this cap is a no-op-ish.
    steps_cap = _round_up(pl.cdiv(n_rows, 2 * num_cores), sublane)
    n_cap = _round_up(n_rows, sublane)            # block never larger than the array
    tile = min(n_cap, fit, _MAX_TILE_N, steps_cap)
    tile = max(sublane, (tile // sublane) * sublane)
    return int(tile)


def _layer1d_kernel(x_ref, g_ref, b_ref, o_ref):
    """Fused LayerNorm(D) + ReLU on a (tile_n, D) row tile.

    x_ref: (tile_n, D)   g_ref/b_ref: (1, D) f32   o_ref: (tile_n, D)
    Single-pass stats: var = E[x^2] - mean^2 (f32). Rows beyond N in the partial
    last grid block operate on uninitialized data; their writes are dropped.
    """
    x = x_ref[...].astype(jnp.float32)
    d = x.shape[-1]
    inv_d = jnp.float32(1.0 / d)

    mean = jnp.sum(x, axis=-1, keepdims=True) * inv_d
    mean_sq = jnp.sum(x * x, axis=-1, keepdims=True) * inv_d
    var = jnp.maximum(mean_sq - mean * mean, 0.0)   # guard cancellation
    inv_std = jax.lax.rsqrt(var + _LN_EPS)

    y = (x - mean) * inv_std * g_ref[...] + b_ref[...]
    y = jnp.maximum(y, 0.0)                         # trans='relu'
    # drop in eval() mode is the identity.
    # TODO(synk): training-mode dropout (pltpu.prng_random_bits mask) not implemented.
    o_ref[...] = y.astype(o_ref.dtype)


@functools.partial(jax.jit, static_argnames=("tile_n", "vmem_limit"))
def _layer1d_call(x, gamma, beta, *, tile_n, vmem_limit):
    n, d = x.shape
    itemsize = jnp.dtype(x.dtype).itemsize

    g2 = gamma.reshape(1, d).astype(jnp.float32)
    b2 = beta.reshape(1, d).astype(jnp.float32)

    return pl.pallas_call(
        _layer1d_kernel,
        out_shape=jax.ShapeDtypeStruct((n, d), x.dtype),
        grid_spec=pltpu.PrefetchScalarGridSpec(
            num_scalar_prefetch=0,
            grid=(pl.cdiv(n, tile_n),),
            in_specs=[
                # Last block dim == full array dim D, so no (8,128) padding is
                # required and no wrapper-side pad/slice HBM passes are needed.
                pl.BlockSpec((tile_n, d), lambda i: (i, 0)),   # x row tile
                pl.BlockSpec((1, d), lambda i: (0, 0)),        # gamma (broadcast)
                pl.BlockSpec((1, d), lambda i: (0, 0)),        # beta  (broadcast)
            ],
            out_specs=pl.BlockSpec((tile_n, d), lambda i: (i, 0)),
        ),
        compiler_params=pltpu.CompilerParams(
            dimension_semantics=("parallel",),
            vmem_limit_bytes=vmem_limit,
        ),
        cost_estimate=pl.CostEstimate(
            flops=8 * n * d,
            transcendentals=n,
            bytes_accessed=2 * n * d * itemsize + 2 * d * 4,
        ),
    )(x, g2, b2)


def layer1d_forward(x, gamma, beta):
    """Layer1D(dim=D, norm='ln', trans='relu', drop=...) eval-mode forward.

    x: (N, D); gamma, beta: (D,). Returns (N, D) in x.dtype.
    """
    n, d = x.shape
    vmem_limit = _vmem_limit_bytes()
    tile_n = _pick_tile_n(n, d, jnp.dtype(x.dtype).itemsize, vmem_limit,
                          _num_tensorcores())
    return _layer1d_call(x, gamma, beta, tile_n=tile_n, vmem_limit=vmem_limit)


def _reference(x, gamma, beta):
    """Pure-JAX reference mirroring torch.nn.LayerNorm + ReLU (eval dropout = id)."""
    xf = x.astype(jnp.float32)
    mean = jnp.mean(xf, axis=-1, keepdims=True)
    var = jnp.mean((xf - mean) ** 2, axis=-1, keepdims=True)
    y = (xf - mean) / jnp.sqrt(var + _LN_EPS) * gamma + beta
    return jnp.maximum(y, 0.0).astype(x.dtype)


if __name__ == "__main__":
    key = jax.random.PRNGKey(0)
    k1, k2, k3, k4 = jax.random.split(key, 4)

    # Case 1: module's small shape — batch=8, hidden=32 (D < 128, now handled with a
    # full-D BlockSpec instead of padding).
    N, D = 8, 32
    x = jax.random.normal(k1, (N, D), dtype=jnp.float32)
    gamma = 1.0 + 0.1 * jax.random.normal(k2, (D,), dtype=jnp.float32)
    beta = 0.1 * jax.random.normal(k3, (D,), dtype=jnp.float32)

    out = jax.block_until_ready(layer1d_forward(x, gamma, beta))
    ref = _reference(x, gamma, beta)
    assert out.shape == (N, D) and out.dtype == jnp.float32
    assert jnp.allclose(out, ref, atol=1e-4, rtol=1e-4), "case1 mismatch vs reference"

    # Case 2: non-divisible batch + lane-dense D (exercises the partial last block
    # and the megacore grid-step cap).
    N2, D2 = 50, 256
    x2 = jax.random.normal(k4, (N2, D2), dtype=jnp.float32)
    g2 = jnp.ones((D2,), dtype=jnp.float32)
    b2 = jnp.zeros((D2,), dtype=jnp.float32)
    out2 = jax.block_until_ready(layer1d_forward(x2, g2, b2))
    ref2 = _reference(x2, g2, b2)
    assert out2.shape == (N2, D2)
    assert jnp.allclose(out2, ref2, atol=1e-4, rtol=1e-4), "case2 mismatch vs reference"

    print("KERNEL_OK")
</pallas_src>

<mosaic_0001>
module attributes {stable_mosaic.version = 11 : i64} {
  func.func @_layer1d_kernel(%arg0: i32, %arg1: memref<8x32xf32, #tpu.memory_space<vmem>>, %arg2: memref<1x32xf32, #tpu.memory_space<vmem>>, %arg3: memref<1x32xf32, #tpu.memory_space<vmem>>, %arg4: memref<8x32xf32, #tpu.memory_space<vmem>>) attributes {dimension_semantics = [#tpu.dimension_semantics<parallel>], iteration_bounds = array<i64: 1>, scalar_prefetch = 0 : i64, scratch_operands = 0 : i64, tpu.core_type = #tpu.core_type<tc>, window_params = [{transform_indices = @transform_0, window_bounds = array<i64: 8, 32>}, {pipeline_mode = #tpu.pipeline_mode<synchronous>, transform_indices = @transform_1, window_bounds = array<i64: 1, 32>}, {pipeline_mode = #tpu.pipeline_mode<synchronous>, transform_indices = @transform_2, window_bounds = array<i64: 1, 32>}, {transform_indices = @transform_3, window_bounds = array<i64: 8, 32>}]} {
    %c0 = arith.constant 0 : index
    %c0_0 = arith.constant 0 : index
    %0 = vector.load %arg1[%c0, %c0_0] : memref<8x32xf32, #tpu.memory_space<vmem>>, vector<8x32xf32>
    %cst = arith.constant dense<0.000000e+00> : vector<8xf32>
    %1 = vector.multi_reduction <add>, %0, %cst [1] : vector<8x32xf32> to vector<8xf32>
    %2 = vector.shape_cast %1 : vector<8xf32> to vector<8x1xf32>
    %cst_1 = arith.constant 3.125000e-02 : f32
    %3 = vector.broadcast %cst_1 : f32 to vector<8x1xf32>
    %4 = arith.mulf %2, %3 : vector<8x1xf32>
    %5 = arith.mulf %0, %0 : vector<8x32xf32>
    %cst_2 = arith.constant dense<0.000000e+00> : vector<8xf32>
    %6 = vector.multi_reduction <add>, %5, %cst_2 [1] : vector<8x32xf32> to vector<8xf32>
    %7 = vector.shape_cast %6 : vector<8xf32> to vector<8x1xf32>
    %cst_3 = arith.constant 3.125000e-02 : f32
    %8 = vector.broadcast %cst_3 : f32 to vector<8x1xf32>
    %9 = arith.mulf %7, %8 : vector<8x1xf32>
    %10 = arith.mulf %4, %4 : vector<8x1xf32>
    %11 = arith.subf %9, %10 : vector<8x1xf32>
    %cst_4 = arith.constant 0.000000e+00 : f32
    %12 = vector.broadcast %cst_4 : f32 to vector<8x1xf32>
    %13 = arith.maximumf %11, %12 : vector<8x1xf32>
    %cst_5 = arith.constant 9.99999974E-6 : f32
    %14 = vector.broadcast %cst_5 : f32 to vector<8x1xf32>
    %15 = arith.addf %13, %14 : vector<8x1xf32>
    %16 = math.rsqrt %15 : vector<8x1xf32>
    %17 = vector.broadcast %4 : vector<8x1xf32> to vector<8x32xf32>
    %18 = arith.subf %0, %17 : vector<8x32xf32>
    %19 = vector.broadcast %16 : vector<8x1xf32> to vector<8x32xf32>
    %20 = arith.mulf %18, %19 : vector<8x32xf32>
    %c0_6 = arith.constant 0 : index
    %c0_7 = arith.constant 0 : index
    %21 = vector.load %arg2[%c0_6, %c0_7] : memref<1x32xf32, #tpu.memory_space<vmem>>, vector<1x32xf32>
    %22 = vector.broadcast %21 : vector<1x32xf32> to vector<8x32xf32>
    %23 = arith.mulf %20, %22 : vector<8x32xf32>
    %c0_8 = arith.constant 0 : index
    %c0_9 = arith.constant 0 : index
    %24 = vector.load %arg3[%c0_8, %c0_9] : memref<1x32xf32, #tpu.memory_space<vmem>>, vector<1x32xf32>
    %25 = vector.broadcast %24 : vector<1x32xf32> to vector<8x32xf32>
    %26 = arith.addf %23, %25 : vector<8x32xf32>
    %cst_10 = arith.constant 0.000000e+00 : f32
    %27 = vector.broadcast %cst_10 : f32 to vector<8x32xf32>
    %28 = arith.maximumf %26, %27 : vector<8x32xf32>
    %c0_11 = arith.constant 0 : index
    %c0_12 = arith.constant 0 : index
    %29 = vector.load %arg4[%c0_11, %c0_12] : memref<8x32xf32, #tpu.memory_space<vmem>>, vector<8x32xf32>
    tpu.vector_store %arg4[%c0_11, %c0_12], %28 {strides = array<i32>} : memref<8x32xf32, #tpu.memory_space<vmem>>, vector<8x32xf32>,
    return
  }
  func.func @transform_0(%arg0: i32) -> (i32, i32) {
    %c0_i32 = arith.constant 0 : i32
    %c0_i32_0 = arith.constant 0 : i32
    return %arg0, %c0_i32 : i32, i32
  }
  func.func @transform_1(%arg0: i32) -> (i32, i32) {
    %c0_i32 = arith.constant 0 : i32
    %c0_i32_0 = arith.constant 0 : i32
    %c0_i32_1 = arith.constant 0 : i32
    return %c0_i32, %c0_i32_0 : i32, i32
  }
  func.func @transform_2(%arg0: i32) -> (i32, i32) {
    %c0_i32 = arith.constant 0 : i32
    %c0_i32_0 = arith.constant 0 : i32
    %c0_i32_1 = arith.constant 0 : i32
    return %c0_i32, %c0_i32_0 : i32, i32
  }
  func.func @transform_3(%arg0: i32) -> (i32, i32) {
    %c0_i32 = arith.constant 0 : i32
    %c0_i32_0 = arith.constant 0 : i32
    return %arg0, %c0_i32 : i32, i32
  }
}

</mosaic_0001>

<llo_original>
// kernel: _layer1d_call.1
$region0: #{_layer1d_call.1}
  #allocation0 [shape = 'u32[]', space=smem, size = 0x4, offset = 0x4, fixed_abs, tag = 'smem constant byte address 0x4 - core index']
  #allocation1 [shape = 'u32[144,128]{1,0:T(1,128)}', space=vmem, size = 0x12000, scoped, tag = 'internal scratch']
  %s0 = inlined_call_operand.hbm [shape: f32[8,32], index: 0, kind: input, shape index: {}]
  %s1 = inlined_call_operand.vmem [shape: f32[1,32], index: 1, kind: input, shape index: {}]
  %s2 = inlined_call_operand.vmem [shape: f32[1,32], index: 2, kind: input, shape index: {}]
  %s3 = inlined_call_operand.hbm [shape: f32[8,32], index: 3, kind: output, shape index: {}]
  %s4 = sld [smem:[#allocation0]]
  $region26: #{_layer1d_call.1} parent=0
    _
  %s6 = ssub.s32 1, %s4
  %s7 = scalar_select 0, %s6, %s4
  $region1: #{_layer1d_call.1} parent=0
    #allocation2 [shape = 'u8[4096]{0}', space=vmem, size = 0x1000, scoped, tag = 'input window, operand 0, single buffered']
    #allocation3 [shape = 's32[1]{0}', space=sflag, size = 0x4, scoped, tag = 'scoped memory for _layer1d_call.1']
    #allocation4 [shape = 's32[1]{0}', space=sflag, size = 0x4, scoped, tag = 'scoped memory for _layer1d_call.1']
    #allocation5 [shape = 'u8[4096]{0}', space=vmem, size = 0x1000, scoped, tag = 'output window, operand 0, single buffered']
    %8 = vsyncpa [#allocation3], 0
    %9 = vsyncpa [#allocation4], 0
    // Predicated region
    $region2: #{_layer1d_call.1} parent=1 // pred_check
      _
    $region3: #{_layer1d_call.1} parent=1 // pred_check_branch
      %11 = sbr.rel (0) target = $region5
    $region4: #{_layer1d_call.1} parent=1 // pred_region
      %s13 = ssub.s32 128, 128
      %14 = vsyncadd [#allocation3], %s13
      %s16 = sshll.u32 [#allocation2], 4
      %s17 = int_to_ptr.vmem [resolvable:$true] %s16
      %19 = dma.hbm_to_vmem [thread:$0]  %s0, 128, %s17, [#allocation3]
    $region5: #{_layer1d_call.1} parent=1 // pred_fallthru
      _
    // Predicated region
    $region6: #{_layer1d_call.1} parent=1 // pred_check
      _
    $region7: #{_layer1d_call.1} parent=1 // pred_check_branch
      %21 = sbr.rel (0) target = $region9
    $region8: #{_layer1d_call.1} parent=1 // pred_region
      _
    $region9: #{_layer1d_call.1} parent=1 // pred_fallthru
      _
    // Predicated region
    $region10: #{_layer1d_call.1} parent=1 // pred_check
      _
    $region11: #{_layer1d_call.1} parent=1 // pred_check_branch
      %23 = sbr.rel (0) target = $region13
    $region12: #{_layer1d_call.1} parent=1 // pred_region
      _
    $region13: #{_layer1d_call.1} parent=1 // pred_fallthru
      _
    // Predicated region
    $region14: #{_layer1d_call.1} parent=1 // pred_check
      _
    $region15: #{_layer1d_call.1} parent=1 // pred_check_branch
      %25 = sbr.rel (0) target = $region17
    $region16: #{_layer1d_call.1} parent=1 // pred_region
      %26 = dma.done [#allocation3], 128
    $region17: #{_layer1d_call.1} parent=1 // pred_fallthru
      _
    %v27 = vld [vmem:[#allocation2] sm:$0xff]
    %vm28 = vcmask 261120
    %v29 = vsel %vm28, %v27, 0.0
    %30 = vadd.xlane.f32.xlu0 %v29
    %v31 = vpop.xlane.xlu0 %30
    %v32 = vmul.f32 %v31, 0.03125
    %v33 = vmul.f32 %v27, %v27
    %v34 = vsel %vm28, %v33, 0.0
    %35 = vadd.xlane.f32.xlu0 %v34
    %v36 = vpop.xlane.xlu0 %35
    %v37 = vmul.f32 %v36, 0.03125
    %v38 = vmul.f32 %v32, %v32
    %v39 = vsub.f32 %v37, %v38
    %v40 = vmax.f32 %v39, 0.0
    %v41 = vadd.f32 %v40, 1e-05
    %v42 = vrsqrt.pop %v41
    %v43 = vsub.f32 %v27, %v32
    %v44 = vmul.f32 %v43, %v42
    %v45 = vld [vmem:[%s1] sm:$0x1]
    %v47 = vlaneseq
    %v48 = vshrl.u32 %v47, 7
    %v49 = vsub.s32 0, %v48
    %v50 = vrot.slane %v45, %v49
    %v52 = vmul.f32 %v44, %v50
    %v53 = vld [vmem:[%s2] sm:$0x1]
    %v55 = vlaneseq
    %v56 = vshrl.u32 %v55, 7
    %v57 = vsub.s32 0, %v56
    %v58 = vrot.slane %v53, %v57
    %v60 = vadd.f32 %v52, %v58
    %v61 = vmax.f32 %v60, 0.0
    %62 = vst.msk [vmem:[#allocation5] sm:$0xff] %vm28, %v61
    // Predicated region
    $region18: #{_layer1d_call.1} parent=1 // pred_check
      _
    $region19: #{_layer1d_call.1} parent=1 // pred_check_branch
      %64 = sbr.rel (0) target = $region21
    $region20: #{_layer1d_call.1} parent=1 // pred_region
      %s66 = ssub.s32 128, 128
      %67 = vsyncadd [#allocation4], %s66
      %s69 = sshll.u32 [#allocation5], 4
      %s70 = int_to_ptr.vmem [resolvable:$true] %s69
      %72 = dma.vmem_to_hbm [thread:$0]  %s70, 128, %s3, [#allocation4]
    $region21: #{_layer1d_call.1} parent=1 // pred_fallthru
      _
    // Predicated region
    $region22: #{_layer1d_call.1} parent=1 // pred_check
      _
    $region23: #{_layer1d_call.1} parent=1 // pred_check_branch
      %74 = sbr.rel (0) target = $region25
    $region24: #{_layer1d_call.1} parent=1 // pred_region
      %75 = dma.done [#allocation4], 128
    $region25: #{_layer1d_call.1} parent=1 // pred_fallthru
      _
    %76 = vsyncpa [#allocation3], 1
    %77 = vsyncpa [#allocation4], 1

</llo_original>
